<compile_context>
chip_gen: v7x
topology: tpu7x:2x2x1
jax: 0.10.0
libtpu: 0.0.40
codegen_flags: <defaults>
</compile_context>

<pallas_src>
import functools

import jax
import jax.numpy as jnp
from jax import lax
from jax.experimental import pallas as pl
from jax.experimental.pallas import tpu as pltpu


def _round_up(n, m):
    return ((n + m - 1) // m) * m


def _tb_kernel(x_ref, w_ref, b_ref, out_ref, xfull_ref, xcol_ref, *,
               TL, H, Hp, Cin, Cin_p, Cout, Cout_p, K, dilation, nL, has_ds):
    """One (batch element, L tile) per grid step, NCL layout (time on lanes).

    x_ref     : (1, Cin, TL)          input tile (caller dtype)
    w_ref     : (M_p, K*Cin_p) bf16   weight-norm-folded conv1 weights, with
                                      the 1x1 downsample stacked below when
                                      has_ds (M_p = 2*Cout_p, else Cout_p)
    b_ref     : (M_p, 1) f32          conv1 bias rows [0:Cout], downsample
                                      bias rows [Cout_p:Cout_p+Cout]
    out_ref   : (1, Cout, TL)
    xfull_ref : (Cin_p, Hp+TL) bf16   persistent scratch: lanes [Hp-H:Hp] hold
                                      the causal halo carried from the previous
                                      L tile, lanes [Hp:] the current tile
    xcol_ref  : (K*Cin_p, TL) bf16    im2col RHS of the fat matmul
    """
    j = pl.program_id(1)

    # Reset halo (causal zero padding) and padded-channel rows at the first L
    # tile of every batch element.  Gated on the L-tile index (NOT the batch
    # index) so it also fires on every TensorCore under megacore sharding.
    if H > 0 or Cin_p > Cin:
        @pl.when(j == 0)
        def _init():
            if H > 0:
                xfull_ref[:, Hp - H:Hp] = jnp.zeros((Cin_p, H),
                                                    xfull_ref.dtype)
            if Cin_p > Cin:
                xfull_ref[Cin:, :] = jnp.zeros((Cin_p - Cin, Hp + TL),
                                               xfull_ref.dtype)

    # Current tile, bf16, written at a 128-aligned lane offset (Hp).
    x_tile = x_ref[0]                                           # (Cin, TL)
    xfull_ref[:Cin, Hp:] = x_tile.astype(xfull_ref.dtype)

    # im2col: tap k needs x shifted right by s = (K-1-k)*dilation.  The shift
    # is a static-lane-offset read of xfull (halo supplies left context /
    # causal zeros) followed by a dense, sublane-aligned store into xcol.
    for k in range(K):
        s = (K - 1 - k) * dilation
        xcol_ref[k * Cin_p:(k + 1) * Cin_p, :] = \
            xfull_ref[:, Hp - s:Hp - s + TL]

    # One fat bf16 MXU matmul covering all K taps (+ fused 1x1 downsample),
    # f32 accumulation.
    acc = jnp.dot(w_ref[...], xcol_ref[...],
                  preferred_element_type=jnp.float32)           # (M_p, TL)
    acc = acc + b_ref[...]

    conv = jnp.maximum(acc[:Cout], 0.0)         # bias + relu1 (Dropout1d == id)
    if has_ds:
        res = acc[Cout_p:Cout_p + Cout]         # fused 1x1 downsample rows
    else:
        res = x_tile.astype(jnp.float32)        # identity residual, exact f32
    out_ref[0] = jnp.maximum(conv + res, 0.0).astype(out_ref.dtype)

    # Carry the last H columns of this tile as the next tile's causal halo.
    if nL > 1 and H > 0:
        xfull_ref[:, Hp - H:Hp] = xfull_ref[:, Hp + TL - H:Hp + TL]


def _choose_tl(L, H):
    """Pick an L tile: multiple of 128, >= halo, dividing L; else full L."""
    if L <= 256:
        return L
    for tl in (1024, 512, 256, 128):
        if tl < L and L % tl == 0 and tl >= max(H, 128):
            return tl
    return L


def temporal_block(x, v, g, b1, wd=None, bd=None, *,
                   kernel_size, stride=1, dilation, padding, dropout=0.2):
    """TemporalBlock forward (eval mode).

    x  : (B, Cin, L)            PyTorch NCL layout (output layout identical)
    v  : (Cout, Cin, K)         conv1 weight_v (weight-norm direction)
    g  : (Cout,)                conv1 weight_g (weight-norm magnitude)
    b1 : (Cout,)                conv1 bias
    wd : (Cout, Cin) or None    1x1 downsample weight (required iff Cin != Cout)
    bd : (Cout,)   or None      downsample bias
    """
    assert stride == 1, "TODO(synk): stride != 1 not implemented (TCN uses 1)"
    del dropout  # Dropout1d is identity in eval mode.
    B, Cin, L = x.shape
    Cout, _, K = v.shape
    assert K == kernel_size
    assert padding == (K - 1) * dilation, "causal TCN padding expected"

    has_ds = Cin != Cout
    if has_ds:
        assert wd is not None and bd is not None

    H = (K - 1) * dilation                       # causal halo / left padding
    Hp = _round_up(H, 128) if H > 0 else 0       # 128-aligned halo slot
    Cin_p = _round_up(Cin, 8)
    Cout_p = _round_up(Cout, 8)
    R = K * Cin_p
    M_p = 2 * Cout_p if has_ds else Cout_p

    # ---- host-side (weight-sized, negligible): fold weight norm, pad, fuse.
    v32 = v.astype(jnp.float32)
    norm = jnp.sqrt(jnp.sum(v32 * v32, axis=(1, 2), keepdims=True))
    w = g.reshape(-1, 1, 1).astype(jnp.float32) * v32 / norm     # (Cout,Cin,K)
    w_okc = jnp.transpose(w, (0, 2, 1))                          # (Cout,K,Cin)
    w_okc = jnp.pad(w_okc, ((0, Cout_p - Cout), (0, 0), (0, Cin_p - Cin)))
    w_conv = w_okc.reshape(Cout_p, R)      # wflat[o, k*Cin_p + c] = w[o, c, k]

    bbig = jnp.zeros((M_p, 1), jnp.float32)
    bbig = bbig.at[:Cout, 0].set(b1.astype(jnp.float32))
    if has_ds:
        w_ds = jnp.zeros((Cout_p, R), jnp.float32)
        w_ds = w_ds.at[:Cout, (K - 1) * Cin_p:(K - 1) * Cin_p + Cin].set(
            wd.astype(jnp.float32))
        wbig = jnp.concatenate([w_conv, w_ds], axis=0)           # (2*Cout_p, R)
        bbig = bbig.at[Cout_p:Cout_p + Cout, 0].set(bd.astype(jnp.float32))
    else:
        wbig = w_conv
    wbig = wbig.astype(jnp.bfloat16)

    TL = _choose_tl(L, H)
    nL = L // TL

    statics = dict(TL=TL, H=H, Hp=Hp, Cin=Cin, Cin_p=Cin_p,
                   Cout=Cout, Cout_p=Cout_p, K=K, dilation=dilation,
                   nL=nL, has_ds=has_ds)
    kernel = functools.partial(_tb_kernel, **statics)

    # VMEM budget: double-buffered x/out blocks + scratch + weights (2 bufs).
    x_bytes = Cin * TL * x.dtype.itemsize
    out_bytes = Cout * TL * x.dtype.itemsize
    scratch_bytes = Cin_p * (Hp + TL) * 2 + R * TL * 2
    weight_bytes = M_p * R * 2 + M_p * 4
    vmem_limit = int(2 * (x_bytes + out_bytes) + scratch_bytes
                     + 2 * weight_bytes + (4 << 20))
    vmem_limit = max(vmem_limit, 16 << 20)

    grid_spec = pltpu.PrefetchScalarGridSpec(
        num_scalar_prefetch=0,
        grid=(B, nL),
        in_specs=[
            pl.BlockSpec((1, Cin, TL), lambda b, j: (b, 0, j)),
            pl.BlockSpec((M_p, R), lambda b, j: (0, 0)),
            pl.BlockSpec((M_p, 1), lambda b, j: (0, 0)),
        ],
        out_specs=pl.BlockSpec((1, Cout, TL), lambda b, j: (b, 0, j)),
        scratch_shapes=[
            pltpu.VMEM((Cin_p, Hp + TL), jnp.bfloat16),   # halo + current tile
            pltpu.VMEM((R, TL), jnp.bfloat16),            # im2col RHS
        ],
    )

    return pl.pallas_call(
        kernel,
        out_shape=jax.ShapeDtypeStruct((B, Cout, L), x.dtype),
        grid_spec=grid_spec,
        compiler_params=pltpu.CompilerParams(
            # Batch is megacore-parallel; the L-tile axis must stay sequential
            # ("arbitrary") because the causal halo is carried in scratch.
            dimension_semantics=("parallel", "arbitrary"),
            vmem_limit_bytes=vmem_limit),
    )(x, wbig, bbig)


def _reference(x, v, g, b1, wd, bd, *, dilation, padding, bf16_operands):
    """Pure-JAX reference mirroring the PyTorch forward (eval mode)."""
    Cout = v.shape[0]
    v32 = v.astype(jnp.float32)
    norm = jnp.sqrt(jnp.sum(v32 * v32, axis=(1, 2), keepdims=True))
    w = g.reshape(-1, 1, 1) * v32 / norm                         # (Cout,Cin,K)
    if bf16_operands:   # mirror the kernel's bf16 MXU operands (f32 accumulate)
        xq = x.astype(jnp.bfloat16).astype(jnp.float32)
        w = w.astype(jnp.bfloat16).astype(jnp.float32)
        wdq = None if wd is None else wd.astype(jnp.bfloat16).astype(jnp.float32)
    else:
        xq, wdq = x, wd
    out = lax.conv_general_dilated(
        xq, w, window_strides=(1,), padding=[(padding, padding)],
        rhs_dilation=(dilation,), dimension_numbers=("NCH", "OIH", "NCH"))
    out = out[:, :, :x.shape[2]] + b1.reshape(1, Cout, 1)        # Chomp1d + bias
    out = jnp.maximum(out, 0.0)                                  # relu1 (+ id dropout)
    if wd is None:
        res = x                                                  # identity (f32)
    else:
        res = jnp.einsum("bcl,oc->bol", xq, wdq) + bd.reshape(1, Cout, 1)
    return jnp.maximum(out + res, 0.0)


def _run_case(key, B, Cin, Cout, L, K, dilation):
    padding = (K - 1) * dilation
    kx, kv, kg, kb1, kwd, kbd = jax.random.split(key, 6)

    x = jax.random.normal(kx, (B, Cin, L), dtype=jnp.float32)
    v = jax.random.normal(kv, (Cout, Cin, K), dtype=jnp.float32) * 0.3
    g = jax.random.uniform(kg, (Cout,), dtype=jnp.float32, minval=0.5, maxval=1.5)
    b1 = jax.random.normal(kb1, (Cout,), dtype=jnp.float32) * 0.1
    if Cin != Cout:
        wd = jax.random.normal(kwd, (Cout, Cin), dtype=jnp.float32) * 0.3
        bd = jax.random.normal(kbd, (Cout,), dtype=jnp.float32) * 0.1
    else:
        wd, bd = None, None

    y = temporal_block(x, v, g, b1, wd, bd,
                       kernel_size=K, dilation=dilation, padding=padding)
    y = jax.block_until_ready(y)
    assert y.shape == (B, Cout, L)

    y_bf16 = _reference(x, v, g, b1, wd, bd, dilation=dilation,
                        padding=padding, bf16_operands=True)
    y_f32 = _reference(x, v, g, b1, wd, bd, dilation=dilation,
                       padding=padding, bf16_operands=False)
    assert jnp.allclose(y, y_bf16, rtol=2e-3, atol=2e-3), \
        "mismatch vs bf16-operand reference"
    assert jnp.allclose(y, y_f32, rtol=1e-1, atol=1e-1), \
        "gross mismatch vs f32 reference"


if __name__ == "__main__":
    key = jax.random.PRNGKey(0)
    k_a, k_b, k_c = jax.random.split(key, 3)

    # Case A: Cin != Cout -> fused 1x1 downsample, single L tile, Cin 4 -> 8 pad.
    _run_case(k_a, B=2, Cin=4, Cout=8, L=16, K=3, dilation=2)

    # Case B: Cin == Cout -> identity residual, L tiled (TL=256, 2 tiles) with
    # the causal halo carried across tiles.
    _run_case(k_b, B=2, Cin=8, Cout=8, L=512, K=3, dilation=4)

    # Case C: downsample + L tiling + odd channel count (sublane padding).
    _run_case(k_c, B=2, Cin=5, Cout=8, L=512, K=4, dilation=3)

    print("KERNEL_OK")
</pallas_src>

<mosaic_0001>
module attributes {stable_mosaic.version = 11 : i64} {
  func.func @_tb_kernel(%arg0: i32, %arg1: i32, %arg2: memref<1x4x16xf32, #tpu.memory_space<vmem>>, %arg3: memref<16x24xbf16, #tpu.memory_space<vmem>>, %arg4: memref<16x1xf32, #tpu.memory_space<vmem>>, %arg5: memref<1x8x16xf32, #tpu.memory_space<vmem>>, %arg6: memref<8x144xbf16, #tpu.memory_space<vmem>>, %arg7: memref<24x16xbf16, #tpu.memory_space<vmem>>) attributes {dimension_semantics = [#tpu.dimension_semantics<parallel>, #tpu.dimension_semantics<arbitrary>], iteration_bounds = array<i64: 2, 1>, scalar_prefetch = 0 : i64, scratch_operands = 2 : i64, tpu.core_type = #tpu.core_type<tc>, window_params = [{transform_indices = @transform_0, window_bounds = array<i64: 1, 4, 16>}, {pipeline_mode = #tpu.pipeline_mode<synchronous>, transform_indices = @transform_1, window_bounds = array<i64: 16, 24>}, {pipeline_mode = #tpu.pipeline_mode<synchronous>, transform_indices = @transform_2, window_bounds = array<i64: 16, 1>}, {transform_indices = @transform_3, window_bounds = array<i64: 1, 8, 16>}]} {
    %c0_i32 = arith.constant 0 : i32
    %0 = arith.cmpi eq, %arg1, %c0_i32 : i32
    %1 = arith.extui %0 : i1 to i32
    %c0_i32_0 = arith.constant 0 : i32
    %2 = arith.cmpi ne, %1, %c0_i32_0 : i32
    scf.if %2 {
      %cst_23 = arith.constant 0.000000e+00 : bf16
      %29 = vector.broadcast %cst_23 : bf16 to vector<8x4xbf16>
      %c0_24 = arith.constant 0 : index
      %c124_25 = arith.constant 124 : index
      %30 = vector.load %arg6[%c0_24, %c124_25] : memref<8x144xbf16, #tpu.memory_space<vmem>>, vector<8x4xbf16>
      tpu.vector_store %arg6[%c0_24, %c124_25], %29 {strides = array<i32>} : memref<8x144xbf16, #tpu.memory_space<vmem>>, vector<8x4xbf16>,
      %cst_26 = arith.constant 0.000000e+00 : bf16
      %31 = vector.broadcast %cst_26 : bf16 to vector<4x144xbf16>
      %c4 = arith.constant 4 : index
      %c0_27 = arith.constant 0 : index
      %32 = vector.load %arg6[%c4, %c0_27] : memref<8x144xbf16, #tpu.memory_space<vmem>>, vector<4x144xbf16>
      tpu.vector_store %arg6[%c4, %c0_27], %31 {strides = array<i32>} : memref<8x144xbf16, #tpu.memory_space<vmem>>, vector<4x144xbf16>,
    } else {
    }
    %c0 = arith.constant 0 : index
    %c0_1 = arith.constant 0 : index
    %c0_2 = arith.constant 0 : index
    %3 = vector.load %arg2[%c0, %c0_1, %c0_2] : memref<1x4x16xf32, #tpu.memory_space<vmem>>, vector<1x4x16xf32>
    %4 = vector.shape_cast %3 : vector<1x4x16xf32> to vector<4x16xf32>
    %5 = arith.truncf %4 : vector<4x16xf32> to vector<4x16xbf16>
    %c0_3 = arith.constant 0 : index
    %c128 = arith.constant 128 : index
    %6 = vector.load %arg6[%c0_3, %c128] : memref<8x144xbf16, #tpu.memory_space<vmem>>, vector<4x16xbf16>
    tpu.vector_store %arg6[%c0_3, %c128], %5 {strides = array<i32>} : memref<8x144xbf16, #tpu.memory_space<vmem>>, vector<4x16xbf16>,
    %c0_4 = arith.constant 0 : index
    %c124 = arith.constant 124 : index
    %7 = vector.load %arg6[%c0_4, %c124] : memref<8x144xbf16, #tpu.memory_space<vmem>>, vector<8x16xbf16>
    %c0_5 = arith.constant 0 : index
    %c0_6 = arith.constant 0 : index
    %8 = vector.load %arg7[%c0_5, %c0_6] : memref<24x16xbf16, #tpu.memory_space<vmem>>, vector<8x16xbf16>
    tpu.vector_store %arg7[%c0_5, %c0_6], %7 {strides = array<i32>} : memref<24x16xbf16, #tpu.memory_space<vmem>>, vector<8x16xbf16>,
    %c0_7 = arith.constant 0 : index
    %c126 = arith.constant 126 : index
    %9 = vector.load %arg6[%c0_7, %c126] : memref<8x144xbf16, #tpu.memory_space<vmem>>, vector<8x16xbf16>
    %c8 = arith.constant 8 : index
    %c0_8 = arith.constant 0 : index
    %10 = vector.load %arg7[%c8, %c0_8] : memref<24x16xbf16, #tpu.memory_space<vmem>>, vector<8x16xbf16>
    tpu.vector_store %arg7[%c8, %c0_8], %9 {strides = array<i32>} : memref<24x16xbf16, #tpu.memory_space<vmem>>, vector<8x16xbf16>,
    %c0_9 = arith.constant 0 : index
    %c128_10 = arith.constant 128 : index
    %11 = vector.load %arg6[%c0_9, %c128_10] : memref<8x144xbf16, #tpu.memory_space<vmem>>, vector<8x16xbf16>
    %c16 = arith.constant 16 : index
    %c0_11 = arith.constant 0 : index
    %12 = vector.load %arg7[%c16, %c0_11] : memref<24x16xbf16, #tpu.memory_space<vmem>>, vector<8x16xbf16>
    tpu.vector_store %arg7[%c16, %c0_11], %11 {strides = array<i32>} : memref<24x16xbf16, #tpu.memory_space<vmem>>, vector<8x16xbf16>,
    %c0_12 = arith.constant 0 : index
    %c0_13 = arith.constant 0 : index
    %13 = vector.load %arg3[%c0_12, %c0_13] : memref<16x24xbf16, #tpu.memory_space<vmem>>, vector<16x24xbf16>
    %c0_14 = arith.constant 0 : index
    %c0_15 = arith.constant 0 : index
    %14 = vector.load %arg7[%c0_14, %c0_15] : memref<24x16xbf16, #tpu.memory_space<vmem>>, vector<24x16xbf16>
    %cst = arith.constant dense<0.000000e+00> : vector<16x16xf32>
    %15 = tpu.matmul %13, %14, %cst {dimension_numbers = #tpu.dot_dimension_numbers<[1], [0], [0], [1], [0, 0, 1, 1], [], []>} : vector<16x24xbf16>, vector<24x16xbf16>, vector<16x16xf32> -> vector<16x16xf32>
    %c0_16 = arith.constant 0 : index
    %c0_17 = arith.constant 0 : index
    %16 = vector.load %arg4[%c0_16, %c0_17] : memref<16x1xf32, #tpu.memory_space<vmem>>, vector<16x1xf32>
    %17 = vector.broadcast %16 : vector<16x1xf32> to vector<16x16xf32>
    %18 = arith.addf %15, %17 : vector<16x16xf32>
    %19 = vector.extract_strided_slice %18 {offsets = [0, 0], sizes = [8, 16], strides = [1, 1]} : vector<16x16xf32> to vector<8x16xf32>
    %cst_18 = arith.constant 0.000000e+00 : f32
    %20 = vector.broadcast %cst_18 : f32 to vector<8x16xf32>
    %21 = arith.maximumf %19, %20 : vector<8x16xf32>
    %22 = vector.extract_strided_slice %18 {offsets = [8, 0], sizes = [8, 16], strides = [1, 1]} : vector<16x16xf32> to vector<8x16xf32>
    %23 = arith.addf %21, %22 : vector<8x16xf32>
    %cst_19 = arith.constant 0.000000e+00 : f32
    %24 = vector.broadcast %cst_19 : f32 to vector<8x16xf32>
    %25 = arith.maximumf %23, %24 : vector<8x16xf32>
    %c0_20 = arith.constant 0 : index
    %c0_21 = arith.constant 0 : index
    %c0_22 = arith.constant 0 : index
    %26 = vector.load %arg5[%c0_20, %c0_21, %c0_22] : memref<1x8x16xf32, #tpu.memory_space<vmem>>, vector<1x8x16xf32>
    %27 = vector.shape_cast %26 : vector<1x8x16xf32> to vector<8x16xf32>
    %28 = vector.shape_cast %25 : vector<8x16xf32> to vector<1x8x16xf32>
    tpu.vector_store %arg5[%c0_20, %c0_21, %c0_22], %28 {strides = array<i32>} : memref<1x8x16xf32, #tpu.memory_space<vmem>>, vector<1x8x16xf32>,
    return
  }
  func.func @transform_0(%arg0: i32, %arg1: i32) -> (i32, i32, i32) {
    %c0_i32 = arith.constant 0 : i32
    %c0_i32_0 = arith.constant 0 : i32
    return %arg0, %c0_i32, %arg1 : i32, i32, i32
  }
  func.func @transform_1(%arg0: i32, %arg1: i32) -> (i32, i32) {
    %c0_i32 = arith.constant 0 : i32
    %c0_i32_0 = arith.constant 0 : i32
    %c0_i32_1 = arith.constant 0 : i32
    return %c0_i32, %c0_i32_0 : i32, i32
  }
  func.func @transform_2(%arg0: i32, %arg1: i32) -> (i32, i32) {
    %c0_i32 = arith.constant 0 : i32
    %c0_i32_0 = arith.constant 0 : i32
    %c0_i32_1 = arith.constant 0 : i32
    return %c0_i32, %c0_i32_0 : i32, i32
  }
  func.func @transform_3(%arg0: i32, %arg1: i32) -> (i32, i32, i32) {
    %c0_i32 = arith.constant 0 : i32
    %c0_i32_0 = arith.constant 0 : i32
    return %arg0, %c0_i32, %arg1 : i32, i32, i32
  }
}

</mosaic_0001>

<llo_original>
// kernel: tpu_custom_call.1
$region0: #{tpu_custom_call.1}
  #allocation0 [shape = 'u32[]', space=smem, size = 0x4, offset = 0x4, fixed_abs, tag = 'smem constant byte address 0x4 - core index']
  #allocation1 [shape = 'u32[144,128]{1,0:T(1,128)}', space=vmem, size = 0x12000, scoped, tag = 'internal scratch']
  #allocation2 [shape = 'bf16[8,144]{1,0:T(8,128)(2,1)}', space=vmem, size = 0x1000, scoped, tag = 'scratch operand']
  #allocation3 [shape = 'bf16[24,16]{1,0:T(8,128)(2,1)}', space=vmem, size = 0x1800, scoped, tag = 'scratch operand']
  %s0 = inlined_call_operand.vmem [shape: f32[2,4,16], index: 0, kind: input, shape index: {}]
  %s1 = inlined_call_operand.vmem [shape: bf16[16,24], index: 1, kind: input, shape index: {}]
  %s2 = inlined_call_operand.vmem [shape: f32[16,1], index: 2, kind: input, shape index: {}]
  %s3 = inlined_call_operand.hbm [shape: f32[2,8,16], index: 3, kind: output, shape index: {}]
  %s4 = sld [smem:[#allocation0]]
  $region49: #{tpu_custom_call.1} parent=0
    _
  %s6 = ssub.s32 1, %s4
  %s7 = scalar_select 0, %s6, %s4
  $region1: #{tpu_custom_call.1} parent=0
    #allocation4 [shape = 'u8[8192]{0}', space=vmem, size = 0x2000, scoped, tag = 'output window, operand 0']
    #allocation5 [shape = 's32[2]{0}', space=sflag, size = 0x8, scoped, tag = 'scoped memory for tpu_custom_call.1']
    %8 = vsyncpa [#allocation5], 0
    %s9 = scalar_lea.sflag [#allocation5], 1
    %10 = vsyncpa %s9, 0
    loop: start=0, step=1, limit=4
    $region2: #{tpu_custom_call.1} parent=1 // loop_pre_header
      _
    $region3: #{tpu_custom_call.1} parent=1 // loop_header
      %s12 = sphi 0, %s16
      %p13 = scmp.ge.s32.totalorder %s12, 4
      %s19 = sphi 0, %s31
      %s20 = sphi 0, %s27
      %s21 = sphi 0, %s19
      %s22 = sphi 0, %s20
      %s23 = sphi 0, %s21
      %s24 = sphi 0, %s22
      %s36 = sphi 0, %s38
      %s39 = sphi 0, %s36
      %s40 = sphi 0, %s39
      %s56 = sphi 0, %s40
      %s60 = sphi 0, %s60
      %s62 = sphi 0, %s60
      %s63 = sphi 0, %s62
      %s77 = sphi 0, %s63
      %s81 = sphi 0, %s81
      %s83 = sphi 0, %s81
      %s84 = sphi 0, %s83
      %s98 = sphi 0, %s84
      %s106 = sphi 0, %s108
      %s109 = sphi 0, %s106
      %s110 = sphi 0, %s109
      %s126 = sphi 0, %s110
    $region4: #{tpu_custom_call.1} parent=1 // loop_header_branch
      %15 = sbr.rel (%p13) target = $region8
    $region5: #{tpu_custom_call.1} parent=1 // loop_body
      %s17 = ssub.s32 %s12, 1
      %s18 = ssub.s32 %s12, 2
      %s25 = sadd.s32 1, %s20
      %p26 = scmp.ge.s32.totalorder %s25, 1
      %s27 = scalar_select %p26, 0, %s25
      %s28 = sadd.s32 1, %s19
      %s29 = scalar_select %p26, %s28, %s19
      %p30 = scmp.ge.s32.totalorder %s29, 2
      %s31 = scalar_select %p30, 0, %s29
      %s32 = ssub.s32 %s19, %s31
      %s33 = ssub.s32 %s20, %s27
      %s34 = sor.u32 %s32, %s33
      %p35 = scmp.eq.s32.totalorder %s34, 0
      %s37 = sadd.s32 %s36, 1
      %s38 = scalar_select %p35, %s36, %s37
      %p41 = pneg %p35
      %p42 = scmp.eq.s32.totalorder %s12, 1
      %p43 = por %p41, %p42
      %p44 = scmp.ne.s32.totalorder %s36, %s39
      %p45 = scmp.eq.s32.totalorder %s12, 0
      %p46 = por %p44, %p45
      %p47 = scmp.ne.s32.totalorder %s36, %s39
      %p48 = scmp.eq.s32.totalorder %s17, 1
      %p49 = por %p47, %p48
      %p50 = scmp.ne.s32.totalorder %s39, %s40
      %p51 = scmp.eq.s32.totalorder %s17, 0
      %p52 = por %p50, %p51
      %p53 = scmp.ne.s32.totalorder %s39, %s40
      %p54 = scmp.eq.s32.totalorder %s18, 1
      %p55 = por %p53, %p54
      %p57 = scmp.ne.s32.totalorder %s40, %s56
      %p58 = scmp.eq.s32.totalorder %s18, 0
      %p59 = por %p57, %p58
      %s61 = sadd.s32 %s60, 1
      %p64 = scmp.eq.s32.totalorder %s12, 1
      %p65 = scmp.ne.s32.totalorder %s60, %s62
      %p66 = scmp.eq.s32.totalorder %s12, 0
      %p67 = por %p65, %p66
      %p68 = scmp.ne.s32.totalorder %s60, %s62
      %p69 = scmp.eq.s32.totalorder %s17, 1
      %p70 = por %p68, %p69
      %p71 = scmp.ne.s32.totalorder %s62, %s63
      %p72 = scmp.eq.s32.totalorder %s17, 0
      %p73 = por %p71, %p72
      %p74 = scmp.ne.s32.totalorder %s62, %s63
      %p75 = scmp.eq.s32.totalorder %s18, 1
      %p76 = por %p74, %p75
      %p78 = scmp.ne.s32.totalorder %s63, %s77
      %p79 = scmp.eq.s32.totalorder %s18, 0
      %p80 = por %p78, %p79
      %s82 = sadd.s32 %s81, 1
      %p85 = scmp.eq.s32.totalorder %s12, 1
      %p86 = scmp.ne.s32.totalorder %s81, %s83
      %p87 = scmp.eq.s32.totalorder %s12, 0
      %p88 = por %p86, %p87
      %p89 = scmp.ne.s32.totalorder %s81, %s83
      %p90 = scmp.eq.s32.totalorder %s17, 1
      %p91 = por %p89, %p90
      %p92 = scmp.ne.s32.totalorder %s83, %s84
      %p93 = scmp.eq.s32.totalorder %s17, 0
      %p94 = por %p92, %p93
      %p95 = scmp.ne.s32.totalorder %s83, %s84
      %p96 = scmp.eq.s32.totalorder %s18, 1
      %p97 = por %p95, %p96
      %p99 = scmp.ne.s32.totalorder %s84, %s98
      %p100 = scmp.eq.s32.totalorder %s18, 0
      %p101 = por %p99, %p100
      %s102 = ssub.s32 %s19, %s31
      %s103 = ssub.s32 %s20, %s27
      %s104 = sor.u32 %s102, %s103
      %p105 = scmp.eq.s32.totalorder %s104, 0
      %s107 = sadd.s32 %s106, 1
      %s108 = scalar_select %p105, %s106, %s107
      %p111 = pneg %p105
      %p112 = scmp.eq.s32.totalorder %s12, 1
      %p113 = por %p111, %p112
      %p114 = scmp.ne.s32.totalorder %s106, %s109
      %p115 = scmp.eq.s32.totalorder %s12, 0
      %p116 = por %p114, %p115
      %p117 = scmp.ne.s32.totalorder %s106, %s109
      %p118 = scmp.eq.s32.totalorder %s17, 1
      %p119 = por %p117, %p118
      %p120 = scmp.ne.s32.totalorder %s109, %s110
      %p121 = scmp.eq.s32.totalorder %s17, 0
      %p122 = por %p120, %p121
      %p123 = scmp.ne.s32.totalorder %s109, %s110
      %p124 = scmp.eq.s32.totalorder %s18, 1
      %p125 = por %p123, %p124
      %p127 = scmp.ne.s32.totalorder %s110, %s126
      %p128 = scmp.eq.s32.totalorder %s18, 0
      %p129 = por %p127, %p128
      %p130 = scmp.le.s32.totalorder 1, %s12
      %p131 = scmp.lt.s32.totalorder %s12, 3
      %p132 = pnand %p130, %p131
      %p133 = pneg %p132
      // Predicated region
      $region9: #{tpu_custom_call.1} parent=5 // pred_check
        _
      $region10: #{tpu_custom_call.1} parent=5 // pred_check_branch
        %135 = sbr.rel (%p132) target = $region12
      $region11: #{tpu_custom_call.1} parent=5 // pred_region
        %s136 = ssub.s32 %s12, 1
        // Predicated region
        $region13: #{tpu_custom_call.1} parent=11 // pred_check
          %p137 = pneg %p73
        $region14: #{tpu_custom_call.1} parent=11 // pred_check_branch
          %139 = sbr.rel (%p137) target = $region16
        $region15: #{tpu_custom_call.1} parent=11 // pred_region
          _
        $region16: #{tpu_custom_call.1} parent=11 // pred_fallthru
          _
        // Predicated region
        $region17: #{tpu_custom_call.1} parent=11 // pred_check
          %p140 = pneg %p94
        $region18: #{tpu_custom_call.1} parent=11 // pred_check_branch
          %142 = sbr.rel (%p140) target = $region20
        $region19: #{tpu_custom_call.1} parent=11 // pred_region
          _
        $region20: #{tpu_custom_call.1} parent=11 // pred_fallthru
          _
      $region12: #{tpu_custom_call.1} parent=5 // pred_fallthru
        _
      %p143 = scmp.lt.s32.totalorder %s12, 2
      // Predicated region
      $region21: #{tpu_custom_call.1} parent=5 // pred_check
        %p144 = pneg %p143
      $region22: #{tpu_custom_call.1} parent=5 // pred_check_branch
        %146 = sbr.rel (%p144) target = $region24
      $region23: #{tpu_custom_call.1} parent=5 // pred_region
        // Predicated region
        $region25: #{tpu_custom_call.1} parent=23 // pred_check
          %p147 = pneg %p46
        $region26: #{tpu_custom_call.1} parent=23 // pred_check_branch
          %149 = sbr.rel (%p147) target = $region28
        $region27: #{tpu_custom_call.1} parent=23 // pred_region
          %p150 = scmp.lt.s32.totalorder %s19, 1
          %s151 = scalar_select %p150, %s19, 1
          %p152 = scmp.lt.s32.totalorder %s20, 0
          %s153 = scalar_select %p152, %s20, 0
          %s154 = sadd.s32 %s153, %s151
          %s155 = smul.addr %s154, 4
          %s156 = scalar_lea.vmem %s0, %s155
        $region28: #{tpu_custom_call.1} parent=23 // pred_fallthru
          _
      $region24: #{tpu_custom_call.1} parent=5 // pred_fallthru
        _
      %p157 = scmp.le.s32.totalorder 1, %s12
      %p158 = scmp.lt.s32.totalorder %s12, 3
      %p159 = pnand %p157, %p158
      %p160 = pneg %p159
      // Predicated region
      $region29: #{tpu_custom_call.1} parent=5 // pred_check
        _
      $region30: #{tpu_custom_call.1} parent=5 // pred_check_branch
        %162 = sbr.rel (%p159) target = $region32
      $region31: #{tpu_custom_call.1} parent=5 // pred_region
        %s163 = ssub.s32 %s12, 1
        %p164 = scmp.lt.s32.totalorder %s21, 1
        %s165 = scalar_select %p164, %s21, 1
        %p166 = scmp.lt.s32.totalorder %s22, 0
        %s167 = scalar_select %p166, %s22, 0
        %s168 = sadd.s32 %s167, %s165
        %s169 = smul.addr %s168, 4
        %s170 = scalar_lea.vmem %s0, %s169
        %p171 = pneg %p52
        %p172 = pneg %p49
        %p173 = pneg %p73
        %p174 = pneg %p70
        %p175 = pneg %p94
        %p176 = pneg %p91
        %p177 = pneg %p122
        %p178 = pneg %p119
        %s179 = sand.u32 %s109, 1
        %s180 = scalar_lea.sflag [#allocation5], %s179
        %s181 = sand.u32 %s109, 1
        %s182 = smul.addr %s181, 8
        %s183 = scalar_lea.vmem [#allocation4], %s182
        %p184 = scmp.lt.s32.totalorder %s21, 1
        %s185 = scalar_select %p184, %s21, 1
        %p186 = scmp.lt.s32.totalorder %s22, 0
        %s187 = scalar_select %p186, %s22, 0
        %s188 = sadd.s32 %s187, %s185
        %s189 = smul.addr %s188, 4
        %s190 = scalar_lea.vmem %s0, %s189
        %p192 = scmp.eq.s32.totalorder %s22, 0
        // Predicated region
        $region33: #{tpu_custom_call.1} parent=31 // pred_check
          %p193 = pneg %p192
        $region34: #{tpu_custom_call.1} parent=31 // pred_check_branch
          %195 = sbr.rel (%p193) target = $region36
        $region35: #{tpu_custom_call.1} parent=31 // pred_region
          %vm196 = vcmask 1044448
          %197 = vst.msk [vmem:[#allocation2] sm:$0xf] %vm196, 0
          %vm198 = vcmask 1043458
          %vm199 = vcmask 130054
          %vm200 = vmor %vm199, %vm198
          %201 = vst.msk [vmem:[#allocation2] sm:$0xcc] %vm200, 0
        $region36: #{tpu_custom_call.1} parent=31 // pred_fallthru
          _
        %v202 = vld [vmem:[%s190] sm:$0xf]
        %v203 = vpack.c.bf16 %v202, %v202
        %vm204 = vcmask 123904
        %205 = vst.msk [vmem:[#allocation2 + $0x4] sm:$0x3] %vm204, %v203
        %v206 = vld [vmem:[#allocation2] sm:$0xff]
        %208 = vrot.lane.b32.xlu0 %v206, 4
        %v209 = vpop.permute.xlu0 %208
        %v210 = vrot.slane %v209, 4
        %vm211 = vcmask 31744
        %v212 = vsel %vm211, %v209, %v210
        %vm214 = vcmask 125952
        %215 = vst.msk [vmem:[#allocation3] sm:$0xf] %vm214, %v212
        %v216 = vld [vmem:[#allocation2] sm:$0xff]
        %218 = vrot.lane.b32.xlu0 %v216, 2
        %v219 = vpop.permute.xlu0 %218
        %v220 = vrot.slane %v219, 4
        %vm221 = vcmask 15360
        %v222 = vsel %vm221, %v219, %v220
        %224 = vst.msk [vmem:[#allocation3 + $0x4] sm:$0xf] %vm214, %v222
        %v225 = vld [vmem:[#allocation2 + $0x4] sm:$0xf]
        %226 = vst.msk [vmem:[#allocation3 + $0x8] sm:$0xf] %vm214, %v225
        %v227 = vld [vmem:[%s1] sm:$0xf]
        %v228 = vld [vmem:[%s1 + $0x4] sm:$0xf]
        %v229 = vld [vmem:[#allocation3] sm:$0xf]
        %v230 = vld [vmem:[#allocation3 + $0x4] sm:$0xf]
        %v231 = vld [vmem:[#allocation3 + $0x8] sm:$0xf]
        %v232 = vld [vmem:[%s2] sm:$0xff]
        %v233 = vld [vmem:[%s2 + $0x8] sm:$0xff]
        %235 = vset.pattern.permute.xlu0 0
        %236 = vperm.xlu0 %235, %v232
        %v237 = vpop.permute.xlu0 %236
        %240 = vset.pattern.permute.xlu0 0
        %241 = vperm.xlu0 %240, %v233
        %v242 = vpop.permute.xlu0 %241
        %v246 = vunpack.c.l.b16 %v227
        %v247 = vunpack.c.l.b16 %v228
        %v248 = vpack.c.b16 %v247, %v246
        %v252 = vunpack.c.l.b16 %v229
        %v253 = vunpack.c.l.b16 %v230
        %v254 = vunpack.c.l.b16 %v231
        %v255 = vpack.c.b16 %v253, %v252
        %v256 = vpack.c.b16 %v254, %v254
        %vm258 = vcmask 195584
        %v260 = vsel %vm258, %v248, 0
        %vm262 = vcmask 1043456
        %v264 = vsel %vm262, %v256, 0
        %266 = vmatprep.subr.bf16.mxu0 0
        %267 = vmatpush1.bf16.msra.mxu0 %v255
        %268 = vmatprep.subr.bf16.mxu0 0
        %269 = vmatpush1.bf16.msra.mxu0 %v264
        %270 = vmatprep.subr.bf16.mxu0 0
        %271 = vmatpush1.bf16.msra.mxu0 0
        %272 = vmatprep.subr.bf16.mxu0 0
        %273 = vmatpush1.bf16.msra.mxu0 0
        %274 = vmatprep.subr.bf16.mxu0 0
        %275 = vmatpush1.bf16.msra.mxu0 0
        %276 = vmatprep.subr.bf16.mxu0 0
        %277 = vmatpush1.bf16.msra.mxu0 0
        %278 = vmatprep.subr.bf16.mxu0 0
        %279 = vmatpush1.bf16.msra.mxu0 0
        %280 = vmatprep.subr.bf16.mxu0 0
        %281 = vmatpush1.bf16.msra.mxu0 0
        %282 = vmatprep.subr.bf16.mxu0 0
        %283 = vmatpush1.bf16.msra.mxu0 0
        %284 = vmatprep.subr.bf16.mxu0 0
        %285 = vmatpush1.bf16.msra.mxu0 0
        %286 = vmatprep.subr.bf16.mxu0 0
        %287 = vmatpush1.bf16.msra.mxu0 0
        %288 = vmatprep.subr.bf16.mxu0 0
        %289 = vmatpush1.bf16.msra.mxu0 0
        %290 = vmatprep.subr.bf16.mxu0 0
        %291 = vmatpush1.bf16.msra.mxu0 0
        %292 = vmatprep.subr.bf16.mxu0 0
        %293 = vmatpush1.bf16.msra.mxu0 0
        %294 = vmatprep.subr.bf16.mxu0 0
        %295 = vmatpush1.bf16.msra.mxu0 0
        %296 = vmatprep.subr.bf16.mxu0 0
        %297 = vmatpush1.bf16.msra.mxu0 0
        %298 = vmatprep.mubr.bf16.mxu0 0
        %299 = vmatmul.mubr.bf16.gmra.mrb[0].mxu0 %v260
        %v300 = vpop.f32.mrb[0].mxu0
        %v301 = vadd.f32 %v237, %v300
        %v302 = vpop.f32.mrb[0].mxu0
        %v303 = vpop.f32.mrb[0].mxu0
        %v304 = vadd.f32 %v242, %v303
        %v305 = vpop.f32.mrb[0].mxu0
        %306 = vdwg.mxu0
        %v307 = vmax.f32 %v301, 0.0
        %v308 = vadd.f32 %v307, %v304
        %v309 = vmax.f32 %v308, 0.0
        %vm310 = vcmask 130048
        %311 = vst.msk [vmem:[%s183] sm:$0xff] %vm310, %v309
        %s312 = sand.u32 %s109, 1
        %s313 = scalar_lea.sflag [#allocation5], %s312
        %s314 = sand.u32 %s109, 1
        %s315 = smul.addr %s314, 8
        %s316 = scalar_lea.vmem [#allocation4], %s315
        // Predicated region
        $region37: #{tpu_custom_call.1} parent=31 // pred_check
          %p317 = pneg %p119
        $region38: #{tpu_custom_call.1} parent=31 // pred_check_branch
          %319 = sbr.rel (%p317) target = $region40
        $region39: #{tpu_custom_call.1} parent=31 // pred_region
          %s321 = ssub.s32 128, 128
          %322 = vsyncadd %s313, %s321
          %s323 = sadd.s32 %s22, %s21
          %s324 = smul.addr %s323, 128
          %s325 = scalar_lea.hbm %s3, %s324
          %s327 = sshll.u32 %s316, 4
          %s328 = int_to_ptr.vmem [resolvable:$true] %s327
          %330 = dma.vmem_to_hbm [thread:$0]  %s328, 128, %s325, %s313
        $region40: #{tpu_custom_call.1} parent=31 // pred_fallthru
          _
      $region32: #{tpu_custom_call.1} parent=5 // pred_fallthru
        _
      %p331 = scmp.le.s32.totalorder 2, %s12
      // Predicated region
      $region41: #{tpu_custom_call.1} parent=5 // pred_check
        %p332 = pneg %p331
      $region42: #{tpu_custom_call.1} parent=5 // pred_check_branch
        %334 = sbr.rel (%p332) target = $region44
      $region43: #{tpu_custom_call.1} parent=5 // pred_region
        %s335 = ssub.s32 %s12, 2
        // Predicated region
        $region45: #{tpu_custom_call.1} parent=43 // pred_check
          %p336 = pneg %p125
        $region46: #{tpu_custom_call.1} parent=43 // pred_check_branch
          %338 = sbr.rel (%p336) target = $region48
        $region47: #{tpu_custom_call.1} parent=43 // pred_region
          %s339 = sand.u32 %s110, 1
          %s340 = scalar_lea.sflag [#allocation5], %s339
          %s341 = sand.u32 %s110, 1
          %s342 = smul.addr %s341, 8
          %s343 = scalar_lea.vmem [#allocation4], %s342
          %344 = dma.done %s340, 128
        $region48: #{tpu_custom_call.1} parent=43 // pred_fallthru
          _
      $region44: #{tpu_custom_call.1} parent=5 // pred_fallthru
        _
    $region6: #{tpu_custom_call.1} parent=1 // loop_footer
      %s16 = sadd.s32 1, %s12
    $region7: #{tpu_custom_call.1} parent=1 // loop_footer_branch
      %11 = sbr.rel target = $region3
    $region8: #{tpu_custom_call.1} parent=1 // loop_exit
      _
    %345 = vsyncpa [#allocation5], 1
    %s346 = scalar_lea.sflag [#allocation5], 1
    %347 = vsyncpa %s346, 1

</llo_original>
